<compile_context>
chip_gen: v7x
topology: tpu7x:2x2x1
jax: 0.10.0
libtpu: 0.0.40
codegen_flags: <defaults>
</compile_context>

<pallas_src>
import functools

import jax
import jax.numpy as jnp
from jax.experimental import pallas as pl
from jax.experimental.pallas import tpu as pltpu


def _focal_loss_kernel(pred_ref, target_ref, out_ref, acc_ref, *,
                       gamma, alpha, n_total, num_classes):
    i = pl.program_id(0)
    n_steps = pl.num_programs(0)

    @pl.when(i == 0)
    def _init():
        acc_ref[0, 0] = jnp.float32(0.0)

    tgt = target_ref[...]                       # (1, TILE_N) int32
    tile_n = tgt.shape[1]

    # Gather pt = pred[target, lane] and a = alpha[target] via an unrolled
    # per-class select (lane-dense, pure VPU work; no cross-lane reduction).
    pt = jnp.zeros((1, tile_n), jnp.float32)
    a = jnp.zeros((1, tile_n), jnp.float32)
    for c in range(num_classes):
        sel = tgt == c
        row = pred_ref[pl.ds(c, 1), :]          # (1, TILE_N) class-c probs
        pt = jnp.where(sel, row, pt)
        a = jnp.where(sel, jnp.float32(alpha[c]), a)

    ce = -jnp.log(pt)                           # EUP (1 transcendental / elem)
    one_minus = 1.0 - pt

    # (1 - pt)**gamma: integer gamma -> repeated multiplies on the VPU;
    # generic float gamma falls back to pow (exp/log on the EUP).
    g = float(gamma)
    if g == 2.0:
        mod = one_minus * one_minus
    elif g >= 0.0 and g == float(int(g)):
        mod = jnp.ones_like(one_minus)
        for _ in range(int(g)):
            mod = mod * one_minus
    else:
        mod = one_minus ** jnp.float32(g)

    focal = a * mod * ce                        # (1, TILE_N)

    # Mask padded tail lanes of the last tile (their pred/target are padding).
    lane = jax.lax.broadcasted_iota(jnp.int32, (1, tile_n), 1)
    valid = (i * tile_n + lane) < n_total
    focal = jnp.where(valid, focal, jnp.float32(0.0))

    acc_ref[0, 0] += jnp.sum(focal)

    @pl.when(i == n_steps - 1)
    def _finalize():
        out_ref[0, 0] = acc_ref[0, 0] / jnp.float32(n_total)   # reduction='mean'


def multiclass_focal_loss(pred, target, alpha, gamma, *, tile_n=512):
    """pred: (N, C) f32 probabilities, target: (N,) int, alpha: length-C weights."""
    N, C = pred.shape
    alpha = tuple(float(a) for a in alpha)       # baked into the kernel as constants
    assert len(alpha) == C

    # Lane-dense layout: classes on sublanes, samples on lanes.
    pred_t = jnp.transpose(pred).astype(jnp.float32)          # (C, N)
    tgt = target.astype(jnp.int32).reshape(1, N)              # (1, N)

    # Pad the sample axis to a multiple of tile_n (safe values: pt -> 1 gives a
    # zero contribution; padded lanes are additionally masked in-kernel).
    n_pad = ((N + tile_n - 1) // tile_n) * tile_n
    if n_pad != N:
        pred_t = jnp.pad(pred_t, ((0, 0), (0, n_pad - N)), constant_values=1.0)
        tgt = jnp.pad(tgt, ((0, 0), (0, n_pad - N)), constant_values=0)
    grid = n_pad // tile_n

    kernel = functools.partial(
        _focal_loss_kernel,
        gamma=float(gamma), alpha=alpha, n_total=N, num_classes=C)

    out = pl.pallas_call(
        kernel,
        out_shape=jax.ShapeDtypeStruct((1, 1), jnp.float32),
        grid_spec=pltpu.PrefetchScalarGridSpec(
            num_scalar_prefetch=0,
            grid=(grid,),
            in_specs=[
                pl.BlockSpec((C, tile_n), lambda i: (0, i)),   # pred (C, N)
                pl.BlockSpec((1, tile_n), lambda i: (0, i)),   # target (1, N)
            ],
            out_specs=pl.BlockSpec(memory_space=pltpu.MemorySpace.SMEM),
            scratch_shapes=[pltpu.SMEM((1, 1), jnp.float32)],  # running sum
        ),
        compiler_params=pltpu.CompilerParams(
            # Accumulator is carried across the N axis -> must be "arbitrary".
            dimension_semantics=("arbitrary",),
        ),
    )(pred_t, tgt)
    return out[0, 0]


if __name__ == "__main__":
    # 3-class problem with the standard focal-loss settings from the spec.
    atom_weight = (0.2, 0.3, 0.5)   # alpha per class
    focal_gamma = 2.0

    # N chosen not to be a multiple of the tile to exercise the tail mask.
    N, C = 1000, 3
    tile_n = 256
    key = jax.random.PRNGKey(0)
    k_logits, k_target = jax.random.split(key)

    # The PyTorch module applies -log directly to the gathered pred, so pred
    # is expected to already be a probability distribution over classes.
    logits = jax.random.normal(k_logits, (N, C), dtype=jnp.float32)
    pred = jax.nn.softmax(logits, axis=-1)
    target = jax.random.randint(k_target, (N,), 0, C, dtype=jnp.int32)

    loss = multiclass_focal_loss(pred, target, atom_weight, focal_gamma,
                                 tile_n=tile_n)
    loss = jax.block_until_ready(loss)

    # Pure-JAX reference (same math, no Pallas).
    pt_ref = jnp.take_along_axis(pred, target[:, None], axis=1)[:, 0]
    a_ref = jnp.asarray(atom_weight, jnp.float32)[target]
    ref = jnp.mean(a_ref * (1.0 - pt_ref) ** focal_gamma * (-jnp.log(pt_ref)))
    assert jnp.allclose(loss, ref, rtol=1e-5, atol=1e-6), (loss, ref)

    print("KERNEL_OK")
</pallas_src>

<mosaic_0001>
module attributes {stable_mosaic.version = 11 : i64} {
  func.func @_focal_loss_kernel(%arg0: i32, %arg1: memref<3x256xf32, #tpu.memory_space<vmem>>, %arg2: memref<1x256xi32, #tpu.memory_space<vmem>>, %arg3: memref<1x1xf32, #tpu.memory_space<smem>>, %arg4: memref<1x1xf32, #tpu.memory_space<smem>>) attributes {dimension_semantics = [#tpu.dimension_semantics<arbitrary>], iteration_bounds = array<i64: 4>, scalar_prefetch = 0 : i64, scratch_operands = 1 : i64, tpu.core_type = #tpu.core_type<tc>, window_params = [{transform_indices = @transform_0, window_bounds = array<i64: 3, 256>}, {transform_indices = @transform_1, window_bounds = array<i64: 1, 256>}, {transform_indices = @transform_2, window_bounds = array<i64: 1, 1>}]} {
    %c0_i32 = arith.constant 0 : i32
    %0 = arith.cmpi eq, %arg0, %c0_i32 : i32
    %1 = arith.extui %0 : i1 to i32
    %c0_i32_0 = arith.constant 0 : i32
    %2 = arith.cmpi ne, %1, %c0_i32_0 : i32
    scf.if %2 {
      %cst_20 = arith.constant 0.000000e+00 : f32
      %c0_21 = arith.constant 0 : index
      %c0_22 = arith.constant 0 : index
      %50 = memref.load %arg4[%c0_21, %c0_22] : memref<1x1xf32, #tpu.memory_space<smem>>
      memref.store %cst_20, %arg4[%c0_21, %c0_22] : memref<1x1xf32, #tpu.memory_space<smem>>
    } else {
    }
    %c0 = arith.constant 0 : index
    %c0_1 = arith.constant 0 : index
    %3 = vector.load %arg2[%c0, %c0_1] : memref<1x256xi32, #tpu.memory_space<vmem>>, vector<1x256xi32>
    %cst = arith.constant 0.000000e+00 : f32
    %4 = vector.broadcast %cst : f32 to vector<1x256xf32>
    %cst_2 = arith.constant 0.000000e+00 : f32
    %5 = vector.broadcast %cst_2 : f32 to vector<1x256xf32>
    %c0_i32_3 = arith.constant 0 : i32
    %6 = vector.broadcast %c0_i32_3 : i32 to vector<1x256xi32>
    %7 = arith.cmpi eq, %3, %6 : vector<1x256xi32>
    %c0_4 = arith.constant 0 : index
    %c0_5 = arith.constant 0 : index
    %8 = vector.load %arg1[%c0_4, %c0_5] : memref<3x256xf32, #tpu.memory_space<vmem>>, vector<1x256xf32>
    %9 = arith.select %7, %8, %4 : vector<1x256xi1>, vector<1x256xf32>
    %cst_6 = arith.constant 2.000000e-01 : f32
    %10 = vector.broadcast %cst_6 : f32 to vector<1x256xf32>
    %11 = arith.select %7, %10, %5 : vector<1x256xi1>, vector<1x256xf32>
    %c1_i32 = arith.constant 1 : i32
    %12 = vector.broadcast %c1_i32 : i32 to vector<1x256xi32>
    %13 = arith.cmpi eq, %3, %12 : vector<1x256xi32>
    %c1 = arith.constant 1 : index
    %c0_7 = arith.constant 0 : index
    %14 = vector.load %arg1[%c1, %c0_7] : memref<3x256xf32, #tpu.memory_space<vmem>>, vector<1x256xf32>
    %15 = arith.select %13, %14, %9 : vector<1x256xi1>, vector<1x256xf32>
    %cst_8 = arith.constant 3.000000e-01 : f32
    %16 = vector.broadcast %cst_8 : f32 to vector<1x256xf32>
    %17 = arith.select %13, %16, %11 : vector<1x256xi1>, vector<1x256xf32>
    %c2_i32 = arith.constant 2 : i32
    %18 = vector.broadcast %c2_i32 : i32 to vector<1x256xi32>
    %19 = arith.cmpi eq, %3, %18 : vector<1x256xi32>
    %c2 = arith.constant 2 : index
    %c0_9 = arith.constant 0 : index
    %20 = vector.load %arg1[%c2, %c0_9] : memref<3x256xf32, #tpu.memory_space<vmem>>, vector<1x256xf32>
    %21 = arith.select %19, %20, %15 : vector<1x256xi1>, vector<1x256xf32>
    %cst_10 = arith.constant 5.000000e-01 : f32
    %22 = vector.broadcast %cst_10 : f32 to vector<1x256xf32>
    %23 = arith.select %19, %22, %17 : vector<1x256xi1>, vector<1x256xf32>
    %24 = math.log %21 : vector<1x256xf32>
    %cst_11 = arith.constant 0.000000e+00 : f32
    %25 = vector.broadcast %cst_11 : f32 to vector<1x256xf32>
    %26 = arith.subf %25, %24 : vector<1x256xf32>
    %cst_12 = arith.constant 1.000000e+00 : f32
    %27 = vector.broadcast %cst_12 : f32 to vector<1x256xf32>
    %28 = arith.subf %27, %21 : vector<1x256xf32>
    %29 = arith.mulf %28, %28 : vector<1x256xf32>
    %30 = arith.mulf %23, %29 : vector<1x256xf32>
    %31 = arith.mulf %30, %26 : vector<1x256xf32>
    %32 = tpu.iota {dimensions = array<i32: 1>} : vector<1x256xi32>
    %c256_i32 = arith.constant 256 : i32
    %33 = arith.muli %arg0, %c256_i32 : i32
    %34 = vector.broadcast %33 : i32 to vector<1x256xi32>
    %35 = arith.addi %34, %32 : vector<1x256xi32>
    %c1000_i32 = arith.constant 1000 : i32
    %36 = vector.broadcast %c1000_i32 : i32 to vector<1x256xi32>
    %37 = arith.cmpi slt, %35, %36 : vector<1x256xi32>
    %cst_13 = arith.constant 0.000000e+00 : f32
    %38 = vector.broadcast %cst_13 : f32 to vector<1x256xf32>
    %39 = arith.select %37, %31, %38 : vector<1x256xi1>, vector<1x256xf32>
    %c0_14 = arith.constant 0 : index
    %c0_15 = arith.constant 0 : index
    %40 = memref.load %arg4[%c0_14, %c0_15] : memref<1x1xf32, #tpu.memory_space<smem>>
    %41 = vector.shape_cast %39 : vector<1x256xf32> to vector<1x1x256xf32>
    %cst_16 = arith.constant dense<0.000000e+00> : vector<1xf32>
    %42 = vector.multi_reduction <add>, %41, %cst_16 [1, 2] : vector<1x1x256xf32> to vector<1xf32>
    %43 = vector.shape_cast %42 : vector<1xf32> to vector<1x1x1xf32>
    %44 = vector.extract %43[0, 0, 0] : f32 from vector<1x1x1xf32>
    %45 = arith.addf %40, %44 : f32
    %c0_17 = arith.constant 0 : index
    %c0_18 = arith.constant 0 : index
    %46 = memref.load %arg4[%c0_17, %c0_18] : memref<1x1xf32, #tpu.memory_space<smem>>
    memref.store %45, %arg4[%c0_17, %c0_18] : memref<1x1xf32, #tpu.memory_space<smem>>
    %c3_i32 = arith.constant 3 : i32
    %47 = arith.cmpi eq, %arg0, %c3_i32 : i32
    %48 = arith.extui %47 : i1 to i32
    %c0_i32_19 = arith.constant 0 : i32
    %49 = arith.cmpi ne, %48, %c0_i32_19 : i32
    scf.if %49 {
      %c0_20 = arith.constant 0 : index
      %c0_21 = arith.constant 0 : index
      %50 = memref.load %arg4[%c0_20, %c0_21] : memref<1x1xf32, #tpu.memory_space<smem>>
      %cst_22 = arith.constant 1.000000e+03 : f32
      %51 = arith.divf %50, %cst_22 : f32
      %c0_23 = arith.constant 0 : index
      %c0_24 = arith.constant 0 : index
      %52 = memref.load %arg3[%c0_23, %c0_24] : memref<1x1xf32, #tpu.memory_space<smem>>
      memref.store %51, %arg3[%c0_23, %c0_24] : memref<1x1xf32, #tpu.memory_space<smem>>
    } else {
    }
    return
  }
  func.func @transform_0(%arg0: i32) -> (i32, i32) {
    %c0_i32 = arith.constant 0 : i32
    %c0_i32_0 = arith.constant 0 : i32
    return %c0_i32, %arg0 : i32, i32
  }
  func.func @transform_1(%arg0: i32) -> (i32, i32) {
    %c0_i32 = arith.constant 0 : i32
    %c0_i32_0 = arith.constant 0 : i32
    return %c0_i32, %arg0 : i32, i32
  }
  func.func @transform_2(%arg0: i32) -> (i32, i32) {
    %c0_i32 = arith.constant 0 : i32
    %c0_i32_0 = arith.constant 0 : i32
    %c0_i32_1 = arith.constant 0 : i32
    return %c0_i32, %c0_i32_0 : i32, i32
  }
}

</mosaic_0001>

<llo_original>
// kernel: tpu_custom_call.1
$region0: #{tpu_custom_call.1}
  #allocation0 [shape = 'u32[]', space=smem, size = 0x4, offset = 0x4, fixed_abs, tag = 'smem constant byte address 0x4 - core index']
  #allocation1 [shape = 'u32[144,128]{1,0:T(1,128)}', space=vmem, size = 0x12000, scoped, tag = 'internal scratch']
  #allocation2 [shape = 'f32[1,1]{1,0:T(1,128)}', space=smem, size = 0x200, scoped, tag = 'scratch operand']
  %s0 = inlined_call_operand.hbm [shape: f32[3,1024], index: 0, kind: input, shape index: {}]
  %s1 = inlined_call_operand.hbm [shape: s32[1,1024], index: 1, kind: input, shape index: {}]
  %s2 = inlined_call_operand.hbm [shape: f32[1,1], index: 2, kind: output, shape index: {}]
  %s3 = sld [smem:[#allocation0]]
  $region57: #{tpu_custom_call.1} parent=0
    _
  %s5 = ssub.s32 1, %s3
  %s6 = scalar_select 0, %s5, %s3
  $region1: #{tpu_custom_call.1} parent=0
    #allocation3 [shape = 'u8[8192]{0}', space=vmem, size = 0x2000, scoped, tag = 'input window, operand 0']
    #allocation4 [shape = 's32[2]{0}', space=sflag, size = 0x8, scoped, tag = 'scoped memory for tpu_custom_call.1']
    #allocation5 [shape = 's32[2]{0}', space=sflag, size = 0x8, scoped, tag = 'scoped memory for tpu_custom_call.1']
    #allocation6 [shape = 'u8[2048]{0}', space=vmem, size = 0x800, scoped, tag = 'input window, operand 1']
    #allocation7 [shape = 's32[2]{0}', space=sflag, size = 0x8, scoped, tag = 'scoped memory for tpu_custom_call.1']
    #allocation8 [shape = 'u8[512]{0}', space=smem, size = 0x200, scoped, tag = 'output window, operand 0, single buffered']
    %7 = vsyncpa [#allocation4], 0
    %s8 = scalar_lea.sflag [#allocation4], 1
    %9 = vsyncpa %s8, 0
    %10 = vsyncpa [#allocation7], 0
    %s11 = scalar_lea.sflag [#allocation7], 1
    %12 = vsyncpa %s11, 0
    %13 = vsyncpa [#allocation5], 0
    loop: start=0, step=1, limit=6
    $region2: #{tpu_custom_call.1} parent=1 // loop_pre_header
      _
    $region3: #{tpu_custom_call.1} parent=1 // loop_header
      %s15 = sphi 0, %s19
      %p16 = scmp.ge.s32.totalorder %s15, 6
      %s25 = sphi 0, %s27
      %s28 = sphi 0, %s25
      %s29 = sphi 0, %s28
      %s45 = sphi 0, %s29
      %s51 = sphi 0, %s53
      %s54 = sphi 0, %s51
      %s55 = sphi 0, %s54
      %s71 = sphi 0, %s55
      %s75 = sphi 0, %s75
      %s77 = sphi 0, %s75
      %s78 = sphi 0, %s77
      %s92 = sphi 0, %s78
    $region4: #{tpu_custom_call.1} parent=1 // loop_header_branch
      %18 = sbr.rel (%p16) target = $region8
    $region5: #{tpu_custom_call.1} parent=1 // loop_body
      %s20 = ssub.s32 %s15, 1
      %s21 = ssub.s32 %s15, 2
      %s22 = sadd.s32 %s15, 1
      %s23 = ssub.s32 %s15, %s22
      %p24 = scmp.eq.s32.totalorder %s23, 0
      %s26 = sadd.s32 %s25, 1
      %s27 = scalar_select %p24, %s25, %s26
      %p30 = pneg %p24
      %p31 = scmp.eq.s32.totalorder %s15, 3
      %p32 = por %p30, %p31
      %p33 = scmp.ne.s32.totalorder %s25, %s28
      %p34 = scmp.eq.s32.totalorder %s15, 0
      %p35 = por %p33, %p34
      %p36 = scmp.ne.s32.totalorder %s25, %s28
      %p37 = scmp.eq.s32.totalorder %s20, 3
      %p38 = por %p36, %p37
      %p39 = scmp.ne.s32.totalorder %s28, %s29
      %p40 = scmp.eq.s32.totalorder %s20, 0
      %p41 = por %p39, %p40
      %p42 = scmp.ne.s32.totalorder %s28, %s29
      %p43 = scmp.eq.s32.totalorder %s21, 3
      %p44 = por %p42, %p43
      %p46 = scmp.ne.s32.totalorder %s29, %s45
      %p47 = scmp.eq.s32.totalorder %s21, 0
      %p48 = por %p46, %p47
      %s49 = ssub.s32 %s15, %s22
      %p50 = scmp.eq.s32.totalorder %s49, 0
      %s52 = sadd.s32 %s51, 1
      %s53 = scalar_select %p50, %s51, %s52
      %p56 = pneg %p50
      %p57 = scmp.eq.s32.totalorder %s15, 3
      %p58 = por %p56, %p57
      %p59 = scmp.ne.s32.totalorder %s51, %s54
      %p60 = scmp.eq.s32.totalorder %s15, 0
      %p61 = por %p59, %p60
      %p62 = scmp.ne.s32.totalorder %s51, %s54
      %p63 = scmp.eq.s32.totalorder %s20, 3
      %p64 = por %p62, %p63
      %p65 = scmp.ne.s32.totalorder %s54, %s55
      %p66 = scmp.eq.s32.totalorder %s20, 0
      %p67 = por %p65, %p66
      %p68 = scmp.ne.s32.totalorder %s54, %s55
      %p69 = scmp.eq.s32.totalorder %s21, 3
      %p70 = por %p68, %p69
      %p72 = scmp.ne.s32.totalorder %s55, %s71
      %p73 = scmp.eq.s32.totalorder %s21, 0
      %p74 = por %p72, %p73
      %s76 = sadd.s32 %s75, 1
      %p79 = scmp.eq.s32.totalorder %s15, 3
      %p80 = scmp.ne.s32.totalorder %s75, %s77
      %p81 = scmp.eq.s32.totalorder %s15, 0
      %p82 = por %p80, %p81
      %p83 = scmp.ne.s32.totalorder %s75, %s77
      %p84 = scmp.eq.s32.totalorder %s20, 3
      %p85 = por %p83, %p84
      %p86 = scmp.ne.s32.totalorder %s77, %s78
      %p87 = scmp.eq.s32.totalorder %s20, 0
      %p88 = por %p86, %p87
      %p89 = scmp.ne.s32.totalorder %s77, %s78
      %p90 = scmp.eq.s32.totalorder %s21, 3
      %p91 = por %p89, %p90
      %p93 = scmp.ne.s32.totalorder %s78, %s92
      %p94 = scmp.eq.s32.totalorder %s21, 0
      %p95 = por %p93, %p94
      %p96 = scmp.le.s32.totalorder 1, %s15
      %p97 = scmp.lt.s32.totalorder %s15, 5
      %p98 = pnand %p96, %p97
      %p99 = pneg %p98
      // Predicated region
      $region9: #{tpu_custom_call.1} parent=5 // pred_check
        _
      $region10: #{tpu_custom_call.1} parent=5 // pred_check_branch
        %101 = sbr.rel (%p98) target = $region12
      $region11: #{tpu_custom_call.1} parent=5 // pred_region
        %s102 = ssub.s32 %s15, 1
      $region12: #{tpu_custom_call.1} parent=5 // pred_fallthru
        _
      %p103 = scmp.lt.s32.totalorder %s15, 4
      // Predicated region
      $region13: #{tpu_custom_call.1} parent=5 // pred_check
        %p104 = pneg %p103
      $region14: #{tpu_custom_call.1} parent=5 // pred_check_branch
        %106 = sbr.rel (%p104) target = $region16
      $region15: #{tpu_custom_call.1} parent=5 // pred_region
        // Predicated region
        $region17: #{tpu_custom_call.1} parent=15 // pred_check
          %p107 = pneg %p35
        $region18: #{tpu_custom_call.1} parent=15 // pred_check_branch
          %109 = sbr.rel (%p107) target = $region20
        $region19: #{tpu_custom_call.1} parent=15 // pred_region
          %s110 = sand.u32 %s25, 1
          %s111 = scalar_lea.sflag [#allocation4], %s110
          %s112 = sand.u32 %s25, 1
          %s113 = smul.addr %s112, 8
          %s114 = scalar_lea.vmem [#allocation3], %s113
          %s115 = smul.u32 2, %s15
          %s117 = ssub.s32 128, 128
          %118 = vsyncadd %s111, %s117
          %s119 = smul.addr %s115, 64
          %s120 = scalar_lea.hbm %s0, %s119
          %s122 = sshll.u32 %s114, 4
          %s123 = int_to_ptr.vmem [resolvable:$true] %s122
          %125 = dma.hbm_to_vmem [thread:$0]  %s120, 128, %s123, %s111
        $region20: #{tpu_custom_call.1} parent=15 // pred_fallthru
          _
        // Predicated region
        $region21: #{tpu_custom_call.1} parent=15 // pred_check
          %p126 = pneg %p61
        $region22: #{tpu_custom_call.1} parent=15 // pred_check_branch
          %128 = sbr.rel (%p126) target = $region24
        $region23: #{tpu_custom_call.1} parent=15 // pred_region
          %s129 = sand.u32 %s51, 1
          %s130 = scalar_lea.sflag [#allocation7], %s129
          %s131 = sand.u32 %s51, 1
          %s132 = smul.addr %s131, 2
          %s133 = scalar_lea.vmem [#allocation6], %s132
          %s134 = smul.u32 2, %s15
          %s136 = ssub.s32 32, 32
          %137 = vsyncadd %s130, %s136
          %s138 = smul.addr %s134, 16
          %s139 = scalar_lea.hbm %s1, %s138
          %s141 = sshll.u32 %s133, 4
          %s142 = int_to_ptr.vmem [resolvable:$true] %s141
          %144 = dma.hbm_to_vmem [thread:$0]  %s139, 32, %s142, %s130
        $region24: #{tpu_custom_call.1} parent=15 // pred_fallthru
          _
      $region16: #{tpu_custom_call.1} parent=5 // pred_fallthru
        _
      %p145 = scmp.le.s32.totalorder 1, %s15
      %p146 = scmp.lt.s32.totalorder %s15, 5
      %p147 = pnand %p145, %p146
      %p148 = pneg %p147
      // Predicated region
      $region25: #{tpu_custom_call.1} parent=5 // pred_check
        _
      $region26: #{tpu_custom_call.1} parent=5 // pred_check_branch
        %150 = sbr.rel (%p147) target = $region28
      $region27: #{tpu_custom_call.1} parent=5 // pred_region
        %s151 = ssub.s32 %s15, 1
        %s152 = sand.u32 %s28, 1
        %s153 = scalar_lea.sflag [#allocation4], %s152
        %s154 = sand.u32 %s28, 1
        %s155 = smul.addr %s154, 8
        %s156 = scalar_lea.vmem [#allocation3], %s155
        // Predicated region
        $region29: #{tpu_custom_call.1} parent=27 // pred_check
          %p157 = pneg %p41
        $region30: #{tpu_custom_call.1} parent=27 // pred_check_branch
          %159 = sbr.rel (%p157) target = $region32
        $region31: #{tpu_custom_call.1} parent=27 // pred_region
          %160 = dma.done %s153, 128
        $region32: #{tpu_custom_call.1} parent=27 // pred_fallthru
          _
        %s161 = sand.u32 %s54, 1
        %s162 = scalar_lea.sflag [#allocation7], %s161
        %s163 = sand.u32 %s54, 1
        %s164 = smul.addr %s163, 2
        %s165 = scalar_lea.vmem [#allocation6], %s164
        // Predicated region
        $region33: #{tpu_custom_call.1} parent=27 // pred_check
          %p166 = pneg %p67
        $region34: #{tpu_custom_call.1} parent=27 // pred_check_branch
          %168 = sbr.rel (%p166) target = $region36
        $region35: #{tpu_custom_call.1} parent=27 // pred_region
          %169 = dma.done %s162, 32
        $region36: #{tpu_custom_call.1} parent=27 // pred_fallthru
          _
        %s170 = sand.u32 %s28, 1
        %s171 = scalar_lea.sflag [#allocation4], %s170
        %s172 = sand.u32 %s28, 1
        %s173 = smul.addr %s172, 8
        %s174 = scalar_lea.vmem [#allocation3], %s173
        %p175 = pneg %p41
        %p176 = pneg %p38
        %s177 = sand.u32 %s54, 1
        %s178 = scalar_lea.sflag [#allocation7], %s177
        %s179 = sand.u32 %s54, 1
        %s180 = smul.addr %s179, 2
        %s181 = scalar_lea.vmem [#allocation6], %s180
        %p182 = pneg %p67
        %p183 = pneg %p64
        %p184 = pneg %p88
        %p185 = pneg %p85
        %s186 = smul.u32 2, %s20
        %s187 = smul.u32 2, %s20
        %p188 = scmp.eq.s32.totalorder %s20, 0
        // Predicated region
        $region37: #{tpu_custom_call.1} parent=27 // pred_check
          %p189 = pneg %p188
        $region38: #{tpu_custom_call.1} parent=27 // pred_check_branch
          %191 = sbr.rel (%p189) target = $region40
        $region39: #{tpu_custom_call.1} parent=27 // pred_region
          %s192 = scalar_lea.smem [#allocation2], 0
          %193 = sst [smem:[%s192]] 0.0
        $region40: #{tpu_custom_call.1} parent=27 // pred_fallthru
          _
        %v194 = vld [vmem:[%s165] sm:$0x3]
        %vm195 = vcmp.eq.s32.totalorder %v194, 0
        %v196 = vld [vmem:[%s156] ss:$4 sm:$0x3]
        %v197 = vsel %vm195, %v196, 0.0
        %v198 = vsel %vm195, 0.2, 0.0
        %vm199 = vcmp.eq.s32.totalorder %v194, 1
        %s200 = scalar_lea.vmem %s156, 1 [#allocation3]
        %v201 = vld [vmem:[%s200] ss:$4 sm:$0x3]
        %v202 = vsel %vm199, %v201, %v197
        %v203 = vsel %vm199, 0.3, %v198
        %vm204 = vcmp.eq.s32.totalorder %v194, 2
        %s205 = scalar_lea.vmem %s156, 2 [#allocation3]
        %v206 = vld [vmem:[%s205] ss:$4 sm:$0x3]
        %v207 = vsel %vm204, %v206, %v202
        %v208 = vsel %vm204, 0.5, %v203
        %v209 = vlog2.pop %v207
        %v210 = vmul.f32 %v209, 0.6931472
        %v211 = vsub.f32 0.0, %v210
        %v212 = vsub.f32 1.0, %v207
        %v213 = vmul.f32 %v212, %v212
        %v214 = vmul.f32 %v208, %v213
        %v215 = vmul.f32 %v214, %v211
        %v216 = vlaneseq
        %v217 = vand.u32 %v216, 127
        %v218 = vadd.s32 %v217, 128
        %s219 = smul.u32 %s20, 256
        %v220 = vstv %s219
        %v221 = vadd.s32 %v220, %v217
        %v222 = vadd.s32 %v220, %v218
        %vm223 = vcmp.lt.s32.totalorder %v221, 1000
        %vm224 = vcmp.lt.s32.totalorder %v222, 1000
        %v226 = vlaneseq
        %v227 = vshrl.u32 %v226, 7
        %v228 = vsub.s32 0, %v227
        %v229 = vrot.slane %v215, %v228
        %v230 = vlaneseq
        %v231 = vshrl.u32 %v230, 7
        %v232 = vsub.s32 1, %v231
        %v233 = vrot.slane %v215, %v232
        %v236 = vsel %vm223, %v229, 0.0
        %v237 = vsel %vm224, %v233, 0.0
        %s238 = sld [smem:[#allocation2]]
        %vm239 = vcmask 1040384
        %v240 = vsel %vm239, %v236, 0.0
        %v241 = vsel %vm239, %v237, 0.0
        %v242 = vadd.f32 %v240, %v241
        %243 = vadd.xlane.f32.xlu0 %v242
        %v244 = vpop.xlane.xlu0 %243
        %v245 = vrot.slane %v244, 4
        %v246 = vadd.f32 %v244, %v245
        %v247 = vrot.slane %v246, 2
        %v248 = vadd.f32 %v246, %v247
        %v249 = vrot.slane %v248, 1
        %v250 = vadd.f32 %v248, %v249
        %s251 = vtos %v250
        %s252 = sadd.f32 %s238, %s251
        %s253 = scalar_lea.smem [#allocation2], 0
        %254 = sst [smem:[%s253]] %s252
        %p255 = scmp.eq.s32.totalorder %s20, 3
        // Predicated region
        $region41: #{tpu_custom_call.1} parent=27 // pred_check
          %p256 = pneg %p255
        $region42: #{tpu_custom_call.1} parent=27 // pred_check_branch
          %258 = sbr.rel (%p256) target = $region44
        $region43: #{tpu_custom_call.1} parent=27 // pred_region
          %s259 = sld [smem:[#allocation2]]
          %v260 = vrcp.pop 1000.0
          %s261 = vtos %v260
          %s262 = smul.f32 %s259, %s261
          %s263 = scalar_lea.smem [#allocation8], 0
          %264 = sst [smem:[%s263]] %s262
        $region44: #{tpu_custom_call.1} parent=27 // pred_fallthru
          _
        // Predicated region
        $region45: #{tpu_custom_call.1} parent=27 // pred_check
          %p265 = pneg %p85
        $region46: #{tpu_custom_call.1} parent=27 // pred_check_branch
          %267 = sbr.rel (%p265) target = $region48
        $region47: #{tpu_custom_call.1} parent=27 // pred_region
          %s269 = ssub.s32 16, 16
          %270 = vsyncadd [#allocation5], %s269
          %273 = dma.smem_to_hbm [#allocation8], 16, %s2, [#allocation5]
        $region48: #{tpu_custom_call.1} parent=27 // pred_fallthru
          _
        // Predicated region
        $region49: #{tpu_custom_call.1} parent=27 // pred_check
          %p274 = pneg %p85
        $region50: #{tpu_custom_call.1} parent=27 // pred_check_branch
          %276 = sbr.rel (%p274) target = $region52
        $region51: #{tpu_custom_call.1} parent=27 // pred_region
          %277 = dma.done [#allocation5], 16
        $region52: #{tpu_custom_call.1} parent=27 // pred_fallthru
          _
        %278 = sfence
      $region28: #{tpu_custom_call.1} parent=5 // pred_fallthru
        _
      %p279 = scmp.le.s32.totalorder 2, %s15
      // Predicated region
      $region53: #{tpu_custom_call.1} parent=5 // pred_check
        %p280 = pneg %p279
      $region54: #{tpu_custom_call.1} parent=5 // pred_check_branch
        %282 = sbr.rel (%p280) target = $region56
      $region55: #{tpu_custom_call.1} parent=5 // pred_region
        %s283 = ssub.s32 %s15, 2
      $region56: #{tpu_custom_call.1} parent=5 // pred_fallthru
        _
    $region6: #{tpu_custom_call.1} parent=1 // loop_footer
      %s19 = sadd.s32 1, %s15
    $region7: #{tpu_custom_call.1} parent=1 // loop_footer_branch
      %14 = sbr.rel target = $region3
    $region8: #{tpu_custom_call.1} parent=1 // loop_exit
      _
    %284 = vsyncpa [#allocation4], 1
    %s285 = scalar_lea.sflag [#allocation4], 1
    %286 = vsyncpa %s285, 1
    %287 = vsyncpa [#allocation7], 1
    %s288 = scalar_lea.sflag [#allocation7], 1
    %289 = vsyncpa %s288, 1
    %290 = vsyncpa [#allocation5], 1
    %s291 = scalar_lea.sflag [#allocation5], 1
    %292 = vsyncpa %s291, 1

</llo_original>
